<compile_context>
chip_gen: v7x
topology: tpu7x:2x2x1
jax: 0.10.0
libtpu: 0.0.40
codegen_flags: <defaults>
</compile_context>

<pallas_src>
import math

import jax
import jax.numpy as jnp
from jax.experimental import pallas as pl
from jax.experimental.pallas import tpu as pltpu


# --------------------------------- kernel ------------------------------------

def _nlp_kernel(loc_ref, logt_ref, inv_ref, z_ref, out_ref):
    """out = log_term - (z - loc)^2 * inv_2var   (all blocks share one shape)."""
    diff = z_ref[...] - loc_ref[...]
    out_ref[...] = logt_ref[...] - diff * diff * inv_ref[...]


# ------------------------------ tiling helpers --------------------------------

_BLOCK_TARGET_ELEMS = 256 * 1024       # ~1 MiB of f32 per block, per array
_HARD_BLOCK_ELEMS = 1024 * 1024        # 4 MiB per block -> bail to the flat path
_ROW_TILE_CAP = 256                    # max sublane rows per block
_VMEM_LIMIT_BYTES = 32 * 1024 * 1024   # explicit scoped-VMEM cap (safe v5e/v6e/v7x)

_FB_ROWS = 64                          # flat-path sublane tile
_FB_LANES = 1024                       # flat-path lane tile (multiple of 128)


def _divisors(n):
    small, large = [], []
    d = 1
    while d * d <= n:
        if n % d == 0:
            small.append(d)
            if d != n // d:
                large.append(n // d)
        d += 1
    return small + large[::-1]


def _split_contiguous_broadcast(p_shape, o_shape):
    """If p_shape broadcasts to o_shape with all expanded axes contiguous, return
    (B, S, L) = (prod(lead), prod(expanded), prod(tail)); else None."""
    p = (1,) * (len(o_shape) - len(p_shape)) + tuple(p_shape)
    o = tuple(o_shape)
    exp = [i for i, (pi, oi) in enumerate(zip(p, o)) if pi == 1 and oi != 1]
    for i, (pi, oi) in enumerate(zip(p, o)):
        if i not in exp and pi != oi:
            return None
    if not exp:                                   # no expansion: all lanes
        return 1, 1, math.prod(o)
    if exp != list(range(exp[0], exp[-1] + 1)):
        return None                               # expanded axes not contiguous
    lead = math.prod(o[:exp[0]])
    mid = math.prod(o[exp[0]:exp[-1] + 1])
    tail = math.prod(o[exp[-1] + 1:])
    return lead, mid, tail


# ------------------------------ pallas wrappers -------------------------------

def _run_structured(loc_p, log_t, inv_2v, z, out_shape, split):
    """Fast path: params kept small, re-used across the broadcast grid axis."""
    B, S, L = split

    # Row (sublane) tile: must divide B and be a multiple of 8 (or the full B).
    tb_cands = [d for d in _divisors(B) if d % 8 == 0 or d == B]
    tile_b_max = max([d for d in tb_cands if d <= _ROW_TILE_CAP],
                     default=min(tb_cands))

    # Lane block = samples_per_block * L; multiple of 128 whenever possible.
    lane_cands = [n for n in _divisors(S) if (n * L) % 128 == 0]
    if lane_cands:
        big_enough = [n for n in lane_cands
                      if n * L * tile_b_max >= _BLOCK_TARGET_ELEMS]
        n_blk = min(big_enough) if big_enough else max(lane_cands)
    elif S * L * tile_b_max <= 2 * _BLOCK_TARGET_ELEMS:
        n_blk = S                         # full lane extent (always a legal block)
    else:
        return None                       # no clean lane-dense tiling
    lane_block = n_blk * L

    fitting = [d for d in tb_cands if d * lane_block <= _BLOCK_TARGET_ELEMS]
    tile_b = max(fitting) if fitting else min(tb_cands)
    if tile_b * lane_block > _HARD_BLOCK_ELEMS:
        return None                       # would blow the VMEM budget

    # z at full shape (usually already is), grouped as (B, S*L) -- free reshape.
    z2 = jnp.broadcast_to(z, out_shape).reshape(B, S * L)
    # Parameters stay small: only ONE lane-block's worth is tiled, and that block
    # is re-used for every step along the broadcast (j) grid axis.
    loc2 = jnp.tile(loc_p.reshape(B, L), (1, n_blk))
    logt2 = jnp.tile(log_t.reshape(B, L), (1, n_blk))
    inv2 = jnp.tile(inv_2v.reshape(B, L), (1, n_blk))

    grid = (B // tile_b, (S * L) // lane_block)
    data_spec = pl.BlockSpec((tile_b, lane_block), lambda i, j: (i, j))
    param_spec = pl.BlockSpec((tile_b, lane_block), lambda i, j: (i, 0))

    out2 = pl.pallas_call(
        _nlp_kernel,
        out_shape=jax.ShapeDtypeStruct((B, S * L), jnp.float32),
        grid_spec=pltpu.PrefetchScalarGridSpec(
            num_scalar_prefetch=0,
            grid=grid,
            in_specs=[param_spec, param_spec, param_spec, data_spec],
            out_specs=data_spec,
        ),
        compiler_params=pltpu.CompilerParams(
            dimension_semantics=("parallel", "parallel"),
            vmem_limit_bytes=_VMEM_LIMIT_BYTES,
        ),
    )(loc2, logt2, inv2, z2)
    return out2.reshape(out_shape)


def _run_flat(loc_p, log_t, inv_2v, z, out_shape):
    """Generic path (irregular broadcast patterns): lane-dense padded flatten."""
    n = math.prod(out_shape)
    chunk = _FB_ROWS * _FB_LANES
    n_pad = pl.cdiv(n, chunk) * chunk
    rows = n_pad // _FB_LANES

    def prep(a):
        a = jnp.broadcast_to(a, out_shape).reshape(-1)
        return jnp.pad(a, (0, n_pad - n)).reshape(rows, _FB_LANES)

    loc2, logt2, inv2, z2 = [prep(a) for a in (loc_p, log_t, inv_2v, z)]
    spec = pl.BlockSpec((_FB_ROWS, _FB_LANES), lambda i: (i, 0))

    out2 = pl.pallas_call(
        _nlp_kernel,
        out_shape=jax.ShapeDtypeStruct((rows, _FB_LANES), jnp.float32),
        grid_spec=pltpu.PrefetchScalarGridSpec(
            num_scalar_prefetch=0,
            grid=(rows // _FB_ROWS,),
            in_specs=[spec, spec, spec, spec],
            out_specs=spec,
        ),
        compiler_params=pltpu.CompilerParams(
            dimension_semantics=("parallel",),
            vmem_limit_bytes=_VMEM_LIMIT_BYTES,
        ),
    )(loc2, logt2, inv2, z2)
    return out2.reshape(-1)[:n].reshape(out_shape)


def normal_log_prob(loc, scale, z):
    """-0.5*log(2*pi*scale^2) - (z-loc)^2 / (2*scale^2), with NumPy broadcasting."""
    loc = jnp.asarray(loc, jnp.float32)
    scale = jnp.asarray(scale, jnp.float32)
    z = jnp.asarray(z, jnp.float32)

    p_shape = jnp.broadcast_shapes(loc.shape, scale.shape)
    out_shape = jnp.broadcast_shapes(p_shape, z.shape)
    if math.prod(out_shape) == 0:
        return jnp.zeros(out_shape, jnp.float32)

    # Small precompute at the *parameter* shape: removes the per-element log and
    # divide from the hot loop and keeps loc/scale out of full-size HBM traffic.
    loc_p = jnp.broadcast_to(loc, p_shape)
    scale_p = jnp.broadcast_to(scale, p_shape)
    var = scale_p * scale_p
    log_t = -0.5 * jnp.log(2.0 * jnp.pi * var)
    inv_2v = 0.5 / var

    split = _split_contiguous_broadcast(p_shape, out_shape)
    if split is not None:
        res = _run_structured(loc_p, log_t, inv_2v, z, out_shape, split)
        if res is not None:
            return res
    return _run_flat(loc_p, log_t, inv_2v, z, out_shape)


def _reference(loc, scale, z):
    var = scale ** 2
    return -0.5 * jnp.log(2.0 * jnp.pi * var) - (z - loc) ** 2 / (2.0 * var)


if __name__ == "__main__":
    key = jax.random.PRNGKey(0)
    k1, k2, k3 = jax.random.split(key, 3)

    # Typical VAE usage: loc/scale per (batch, 1, latent), z per (batch, samples, latent).
    batch, n_samples, latent = 2, 8, 32
    loc = jax.random.normal(k1, (batch, 1, latent), dtype=jnp.float32)
    scale = jax.nn.softplus(jax.random.normal(k2, (batch, 1, latent), dtype=jnp.float32)) + 0.1
    z = jax.random.normal(k3, (batch, n_samples, latent), dtype=jnp.float32)

    out = normal_log_prob(loc, scale, z)
    jax.block_until_ready(out)
    ref = _reference(loc, scale, z)
    assert out.shape == (batch, n_samples, latent)
    assert jnp.allclose(out, ref, atol=1e-5, rtol=1e-5), "mismatch vs reference (VAE shapes)"

    # No-broadcast / scalar-scale case (exercises the all-lanes structured tiling).
    loc2 = jax.random.normal(k1, (4, 8, 32), dtype=jnp.float32)
    scale2 = jnp.float32(0.7)
    z2 = jax.random.normal(k3, (4, 8, 32), dtype=jnp.float32)
    out2 = normal_log_prob(loc2, scale2, z2)
    jax.block_until_ready(out2)
    assert jnp.allclose(out2, _reference(loc2, scale2, z2), atol=1e-5, rtol=1e-5), \
        "mismatch vs reference (scalar scale)"

    # Non-contiguous broadcast pattern -> generic lane-dense flat path.
    loc3 = jax.random.normal(k2, (2, 1, 4, 1), dtype=jnp.float32)
    scale3 = jax.nn.softplus(jax.random.normal(k1, (2, 1, 4, 1), dtype=jnp.float32)) + 0.1
    z3 = jax.random.normal(k3, (2, 3, 4, 5), dtype=jnp.float32)
    out3 = normal_log_prob(loc3, scale3, z3)
    jax.block_until_ready(out3)
    assert jnp.allclose(out3, _reference(loc3, scale3, z3), atol=1e-5, rtol=1e-5), \
        "mismatch vs reference (flat path)"

    print("KERNEL_OK")
</pallas_src>

<mosaic_0001>
module attributes {stable_mosaic.version = 11 : i64} {
  func.func @_nlp_kernel(%arg0: i32, %arg1: i32, %arg2: memref<2x256xf32, #tpu.memory_space<vmem>>, %arg3: memref<2x256xf32, #tpu.memory_space<vmem>>, %arg4: memref<2x256xf32, #tpu.memory_space<vmem>>, %arg5: memref<2x256xf32, #tpu.memory_space<vmem>>, %arg6: memref<2x256xf32, #tpu.memory_space<vmem>>) attributes {dimension_semantics = [#tpu.dimension_semantics<parallel>, #tpu.dimension_semantics<parallel>], iteration_bounds = array<i64: 1, 1>, scalar_prefetch = 0 : i64, scratch_operands = 0 : i64, tpu.core_type = #tpu.core_type<tc>, window_params = [{transform_indices = @transform_0, window_bounds = array<i64: 2, 256>}, {transform_indices = @transform_1, window_bounds = array<i64: 2, 256>}, {transform_indices = @transform_2, window_bounds = array<i64: 2, 256>}, {transform_indices = @transform_3, window_bounds = array<i64: 2, 256>}, {transform_indices = @transform_4, window_bounds = array<i64: 2, 256>}]} {
    %c0 = arith.constant 0 : index
    %c0_0 = arith.constant 0 : index
    %0 = vector.load %arg5[%c0, %c0_0] : memref<2x256xf32, #tpu.memory_space<vmem>>, vector<2x256xf32>
    %c0_1 = arith.constant 0 : index
    %c0_2 = arith.constant 0 : index
    %1 = vector.load %arg2[%c0_1, %c0_2] : memref<2x256xf32, #tpu.memory_space<vmem>>, vector<2x256xf32>
    %2 = arith.subf %0, %1 : vector<2x256xf32>
    %c0_3 = arith.constant 0 : index
    %c0_4 = arith.constant 0 : index
    %3 = vector.load %arg3[%c0_3, %c0_4] : memref<2x256xf32, #tpu.memory_space<vmem>>, vector<2x256xf32>
    %4 = arith.mulf %2, %2 : vector<2x256xf32>
    %c0_5 = arith.constant 0 : index
    %c0_6 = arith.constant 0 : index
    %5 = vector.load %arg4[%c0_5, %c0_6] : memref<2x256xf32, #tpu.memory_space<vmem>>, vector<2x256xf32>
    %6 = arith.mulf %4, %5 : vector<2x256xf32>
    %7 = arith.subf %3, %6 : vector<2x256xf32>
    %c0_7 = arith.constant 0 : index
    %c0_8 = arith.constant 0 : index
    %8 = vector.load %arg6[%c0_7, %c0_8] : memref<2x256xf32, #tpu.memory_space<vmem>>, vector<2x256xf32>
    tpu.vector_store %arg6[%c0_7, %c0_8], %7 {strides = array<i32>} : memref<2x256xf32, #tpu.memory_space<vmem>>, vector<2x256xf32>,
    return
  }
  func.func @transform_0(%arg0: i32, %arg1: i32) -> (i32, i32) {
    %c0_i32 = arith.constant 0 : i32
    %c0_i32_0 = arith.constant 0 : i32
    return %arg0, %c0_i32 : i32, i32
  }
  func.func @transform_1(%arg0: i32, %arg1: i32) -> (i32, i32) {
    %c0_i32 = arith.constant 0 : i32
    %c0_i32_0 = arith.constant 0 : i32
    return %arg0, %c0_i32 : i32, i32
  }
  func.func @transform_2(%arg0: i32, %arg1: i32) -> (i32, i32) {
    %c0_i32 = arith.constant 0 : i32
    %c0_i32_0 = arith.constant 0 : i32
    return %arg0, %c0_i32 : i32, i32
  }
  func.func @transform_3(%arg0: i32, %arg1: i32) -> (i32, i32) {
    %c0_i32 = arith.constant 0 : i32
    return %arg0, %arg1 : i32, i32
  }
  func.func @transform_4(%arg0: i32, %arg1: i32) -> (i32, i32) {
    %c0_i32 = arith.constant 0 : i32
    return %arg0, %arg1 : i32, i32
  }
}

</mosaic_0001>

<llo_original>
// kernel: tpu_custom_call.1
$region0: #{tpu_custom_call.1}
  #allocation0 [shape = 'u32[]', space=smem, size = 0x4, offset = 0x4, fixed_abs, tag = 'smem constant byte address 0x4 - core index']
  #allocation1 [shape = 'u32[144,128]{1,0:T(1,128)}', space=vmem, size = 0x12000, scoped, tag = 'internal scratch']
  %s0 = inlined_call_operand.hbm [shape: f32[2,256], index: 0, kind: input, shape index: {}]
  %s1 = inlined_call_operand.hbm [shape: f32[2,256], index: 1, kind: input, shape index: {}]
  %s2 = inlined_call_operand.vmem [shape: f32[2,256], index: 2, kind: input, shape index: {}]
  %s3 = inlined_call_operand.vmem [shape: f32[2,256], index: 3, kind: input, shape index: {}]
  %s4 = inlined_call_operand.hbm [shape: f32[2,256], index: 4, kind: output, shape index: {}]
  %s5 = sld [smem:[#allocation0]]
  $region34: #{tpu_custom_call.1} parent=0
    _
  %s7 = ssub.s32 1, %s5
  %s8 = scalar_select 0, %s7, %s5
  $region1: #{tpu_custom_call.1} parent=0
    #allocation2 [shape = 'u8[2048]{0}', space=vmem, size = 0x800, scoped, tag = 'input window, operand 0, single buffered']
    #allocation3 [shape = 's32[1]{0}', space=sflag, size = 0x4, scoped, tag = 'scoped memory for tpu_custom_call.1']
    #allocation4 [shape = 's32[1]{0}', space=sflag, size = 0x4, scoped, tag = 'scoped memory for tpu_custom_call.1']
    #allocation5 [shape = 'u8[2048]{0}', space=vmem, size = 0x800, scoped, tag = 'input window, operand 1, single buffered']
    #allocation6 [shape = 's32[1]{0}', space=sflag, size = 0x4, scoped, tag = 'scoped memory for tpu_custom_call.1']
    #allocation7 [shape = 'u8[2048]{0}', space=vmem, size = 0x800, scoped, tag = 'output window, operand 0, single buffered']
    %9 = vsyncpa [#allocation3], 0
    %10 = vsyncpa [#allocation6], 0
    %11 = vsyncpa [#allocation4], 0
    // Predicated region
    $region2: #{tpu_custom_call.1} parent=1 // pred_check
      _
    $region3: #{tpu_custom_call.1} parent=1 // pred_check_branch
      %13 = sbr.rel (0) target = $region5
    $region4: #{tpu_custom_call.1} parent=1 // pred_region
      %s15 = ssub.s32 64, 64
      %16 = vsyncadd [#allocation3], %s15
      %s18 = sshll.u32 [#allocation2], 4
      %s19 = int_to_ptr.vmem [resolvable:$true] %s18
      %21 = dma.hbm_to_vmem [thread:$0]  %s0, 64, %s19, [#allocation3]
    $region5: #{tpu_custom_call.1} parent=1 // pred_fallthru
      _
    // Predicated region
    $region6: #{tpu_custom_call.1} parent=1 // pred_check
      _
    $region7: #{tpu_custom_call.1} parent=1 // pred_check_branch
      %23 = sbr.rel (0) target = $region9
    $region8: #{tpu_custom_call.1} parent=1 // pred_region
      %s25 = ssub.s32 64, 64
      %26 = vsyncadd [#allocation6], %s25
      %s28 = sshll.u32 [#allocation5], 4
      %s29 = int_to_ptr.vmem [resolvable:$true] %s28
      %31 = dma.hbm_to_vmem [thread:$0]  %s1, 64, %s29, [#allocation6]
    $region9: #{tpu_custom_call.1} parent=1 // pred_fallthru
      _
    // Predicated region
    $region10: #{tpu_custom_call.1} parent=1 // pred_check
      _
    $region11: #{tpu_custom_call.1} parent=1 // pred_check_branch
      %33 = sbr.rel (0) target = $region13
    $region12: #{tpu_custom_call.1} parent=1 // pred_region
      _
    $region13: #{tpu_custom_call.1} parent=1 // pred_fallthru
      _
    // Predicated region
    $region14: #{tpu_custom_call.1} parent=1 // pred_check
      _
    $region15: #{tpu_custom_call.1} parent=1 // pred_check_branch
      %35 = sbr.rel (0) target = $region17
    $region16: #{tpu_custom_call.1} parent=1 // pred_region
      _
    $region17: #{tpu_custom_call.1} parent=1 // pred_fallthru
      _
    // Predicated region
    $region18: #{tpu_custom_call.1} parent=1 // pred_check
      _
    $region19: #{tpu_custom_call.1} parent=1 // pred_check_branch
      %37 = sbr.rel (0) target = $region21
    $region20: #{tpu_custom_call.1} parent=1 // pred_region
      %38 = dma.done [#allocation3], 64
    $region21: #{tpu_custom_call.1} parent=1 // pred_fallthru
      _
    // Predicated region
    $region22: #{tpu_custom_call.1} parent=1 // pred_check
      _
    $region23: #{tpu_custom_call.1} parent=1 // pred_check_branch
      %40 = sbr.rel (0) target = $region25
    $region24: #{tpu_custom_call.1} parent=1 // pred_region
      %41 = dma.done [#allocation6], 64
    $region25: #{tpu_custom_call.1} parent=1 // pred_fallthru
      _
    %v42 = vld [vmem:[%s3] sm:$0xf]
    %v43 = vld [vmem:[#allocation2] sm:$0xf]
    %v44 = vsub.f32 %v42, %v43
    %v45 = vld [vmem:[#allocation5] sm:$0xf]
    %v46 = vmul.f32 %v44, %v44
    %v47 = vld [vmem:[%s2] sm:$0xf]
    %v48 = vmul.f32 %v46, %v47
    %v49 = vsub.f32 %v45, %v48
    %50 = vst [vmem:[#allocation7] sm:$0xf] %v49
    // Predicated region
    $region26: #{tpu_custom_call.1} parent=1 // pred_check
      _
    $region27: #{tpu_custom_call.1} parent=1 // pred_check_branch
      %52 = sbr.rel (0) target = $region29
    $region28: #{tpu_custom_call.1} parent=1 // pred_region
      %s54 = ssub.s32 64, 64
      %55 = vsyncadd [#allocation4], %s54
      %s57 = sshll.u32 [#allocation7], 4
      %s58 = int_to_ptr.vmem [resolvable:$true] %s57
      %60 = dma.vmem_to_hbm [thread:$0]  %s58, 64, %s4, [#allocation4]
    $region29: #{tpu_custom_call.1} parent=1 // pred_fallthru
      _
    // Predicated region
    $region30: #{tpu_custom_call.1} parent=1 // pred_check
      _
    $region31: #{tpu_custom_call.1} parent=1 // pred_check_branch
      %62 = sbr.rel (0) target = $region33
    $region32: #{tpu_custom_call.1} parent=1 // pred_region
      %63 = dma.done [#allocation4], 64
    $region33: #{tpu_custom_call.1} parent=1 // pred_fallthru
      _
    %64 = vsyncpa [#allocation3], 1
    %65 = vsyncpa [#allocation6], 1
    %66 = vsyncpa [#allocation4], 1

</llo_original>
